<compile_context>
chip_gen: v5e
topology: v5e:2x2
jax: 0.10.0
libtpu: 0.0.40
codegen_flags: <defaults>
</compile_context>

<pallas_src>
import jax
import jax.numpy as jnp
from jax.experimental import pallas as pl
from jax.experimental.pallas import tpu as pltpu

IN_FEATURES = 6 * 7      # 42
HIDDEN = 128
OUT_FEATURES = 7


def _round_up(x: int, m: int) -> int:
    return ((x + m - 1) // m) * m


def dqn_kernel(x_ref, w1_ref, b1_ref, w2_ref, b2_ref, o_ref):
    # x_ref:  (Bt, 42)  bf16      w1_ref: (42, 128) bf16    b1_ref: (1, 128) f32
    # w2_ref: (128, 128) f32 (zero-padded cols >= 7)         b2_ref: (1, 128) f32
    # o_ref:  (Bt, 7)   f32
    # dense1 + ReLU: bf16 x bf16 on the MXU, f32 accumulate; bias/ReLU in f32.
    h = jnp.dot(x_ref[...], w1_ref[...], preferred_element_type=jnp.float32)
    h = jnp.maximum(h + b1_ref[...], 0.0)

    # dense2 on lane-padded weights (full 128-wide MXU pop), f32 accumulate.
    out = jnp.dot(h, w2_ref[...], preferred_element_type=jnp.float32)
    out = out + b2_ref[...]

    # Write back only the valid 7 output columns (external shape stays (B, 7)).
    o_ref[...] = out[:, :OUT_FEATURES].astype(o_ref.dtype)


def dqn_forward(state, w1, b1, w2, b2, *, block_b: int = 2048):
    """state: (B, 6, 7) float32 -> (B, 7) float32.

    w1: (42, 128), b1: (128,), w2: (128, 7), b2: (7,)  (transposed vs PyTorch).
    """
    B = state.shape[0]

    # Flatten + bf16 cast (halves the dominant HBM stream); pure-JAX glue.
    x = state.reshape(B, IN_FEATURES).astype(jnp.bfloat16)

    # Batch tile: multiple of 8, capped so double-buffered (Bt,128)-padded
    # tiles stay a few MiB (safe on v7x's 64 MiB VMEM as well as v5e/v6e).
    bt = min(block_b, _round_up(B, 8))
    b_pad = _round_up(B, bt)
    if b_pad != B:
        x = jnp.pad(x, ((0, b_pad - B), (0, 0)))

    # Parameters: w1 in bf16 (MXU operand), biases f32, w2/b2 lane-padded to 128.
    w1_bf = w1.astype(jnp.bfloat16)
    b1_2d = b1.reshape(1, HIDDEN).astype(jnp.float32)
    w2_pad = jnp.zeros((HIDDEN, HIDDEN), jnp.float32).at[:, :OUT_FEATURES].set(
        w2.astype(jnp.float32))
    b2_pad = jnp.zeros((1, HIDDEN), jnp.float32).at[0, :OUT_FEATURES].set(
        b2.astype(jnp.float32))

    grid = (b_pad // bt,)

    flops = 2 * b_pad * (IN_FEATURES * HIDDEN + HIDDEN * OUT_FEATURES)
    bytes_accessed = (
        b_pad * IN_FEATURES * 2          # x in (bf16)
        + b_pad * OUT_FEATURES * 4       # out
        + IN_FEATURES * HIDDEN * 2       # w1 (bf16)
        + HIDDEN * 4                     # b1
        + HIDDEN * HIDDEN * 4            # w2 (padded)
        + HIDDEN * 4                     # b2 (padded)
    )

    out = pl.pallas_call(
        dqn_kernel,
        out_shape=jax.ShapeDtypeStruct((b_pad, OUT_FEATURES), jnp.float32),
        grid=grid,
        in_specs=[
            pl.BlockSpec((bt, IN_FEATURES), lambda i: (i, 0)),       # x: streamed
            pl.BlockSpec((IN_FEATURES, HIDDEN), lambda i: (0, 0)),   # w1: resident
            pl.BlockSpec((1, HIDDEN), lambda i: (0, 0)),             # b1: resident
            pl.BlockSpec((HIDDEN, HIDDEN), lambda i: (0, 0)),        # w2: resident
            pl.BlockSpec((1, HIDDEN), lambda i: (0, 0)),             # b2: resident
        ],
        out_specs=pl.BlockSpec((bt, OUT_FEATURES), lambda i: (i, 0)),
        compiler_params=pltpu.CompilerParams(
            dimension_semantics=("parallel",),
            vmem_limit_bytes=32 * 1024 * 1024,
        ),
        cost_estimate=pl.CostEstimate(
            flops=flops, transcendentals=0, bytes_accessed=bytes_accessed),
    )(x, w1_bf, b1_2d, w2_pad, b2_pad)

    return out[:B]


def init_params(key):
    """Deterministic init mirroring nn.Linear shapes (stored transposed)."""
    k1, k2, k3, k4 = jax.random.split(key, 4)
    # PyTorch nn.Linear uses U(-1/sqrt(fan_in), 1/sqrt(fan_in)); replicate bounds.
    bound1 = 1.0 / jnp.sqrt(float(IN_FEATURES))
    bound2 = 1.0 / jnp.sqrt(float(HIDDEN))
    w1 = jax.random.uniform(k1, (IN_FEATURES, HIDDEN), jnp.float32, -bound1, bound1)
    b1 = jax.random.uniform(k2, (HIDDEN,), jnp.float32, -bound1, bound1)
    w2 = jax.random.uniform(k3, (HIDDEN, OUT_FEATURES), jnp.float32, -bound2, bound2)
    b2 = jax.random.uniform(k4, (OUT_FEATURES,), jnp.float32, -bound2, bound2)
    return w1, b1, w2, b2


if __name__ == "__main__":
    key = jax.random.PRNGKey(0)
    k_param, k_in = jax.random.split(key)

    w1, b1, w2, b2 = init_params(k_param)

    B = 4
    state = jax.random.normal(k_in, (B, 6, 7), dtype=jnp.float32)

    out = dqn_forward(state, w1, b1, w2, b2)
    out = jax.block_until_ready(out)

    # Reference in plain JAX, using the same bf16 input/weight cast as the
    # kernel (f32 accumulation), so tolerances stay tight.
    x_bf = state.reshape(B, IN_FEATURES).astype(jnp.bfloat16).astype(jnp.float32)
    w1_bf = w1.astype(jnp.bfloat16).astype(jnp.float32)
    ref = jnp.maximum(x_bf @ w1_bf + b1, 0.0) @ w2 + b2

    assert out.shape == (B, OUT_FEATURES)
    assert jnp.allclose(out, ref, atol=1e-3, rtol=1e-3), (
        float(jnp.max(jnp.abs(out - ref))))

    print("KERNEL_OK")
</pallas_src>

<mosaic_0001>
module attributes {stable_mosaic.version = 11 : i64} {
  func.func @dqn_kernel(%arg0: i32, %arg1: memref<8x42xbf16, #tpu.memory_space<vmem>>, %arg2: memref<42x128xbf16, #tpu.memory_space<vmem>>, %arg3: memref<1x128xf32, #tpu.memory_space<vmem>>, %arg4: memref<128x128xf32, #tpu.memory_space<vmem>>, %arg5: memref<1x128xf32, #tpu.memory_space<vmem>>, %arg6: memref<8x7xf32, #tpu.memory_space<vmem>>) attributes {dimension_semantics = [#tpu.dimension_semantics<parallel>], iteration_bounds = array<i64: 1>, scalar_prefetch = 0 : i64, scratch_operands = 0 : i64, tpu.core_type = #tpu.core_type<tc>, window_params = [{transform_indices = @transform_0, window_bounds = array<i64: 8, 42>}, {pipeline_mode = #tpu.pipeline_mode<synchronous>, transform_indices = @transform_1, window_bounds = array<i64: 42, 128>}, {pipeline_mode = #tpu.pipeline_mode<synchronous>, transform_indices = @transform_2, window_bounds = array<i64: 1, 128>}, {pipeline_mode = #tpu.pipeline_mode<synchronous>, transform_indices = @transform_3, window_bounds = array<i64: 128, 128>}, {pipeline_mode = #tpu.pipeline_mode<synchronous>, transform_indices = @transform_4, window_bounds = array<i64: 1, 128>}, {transform_indices = @transform_5, window_bounds = array<i64: 8, 7>}]} {
    %c0 = arith.constant 0 : index
    %c0_0 = arith.constant 0 : index
    %0 = vector.load %arg1[%c0, %c0_0] : memref<8x42xbf16, #tpu.memory_space<vmem>>, vector<8x42xbf16>
    %c0_1 = arith.constant 0 : index
    %c0_2 = arith.constant 0 : index
    %1 = vector.load %arg2[%c0_1, %c0_2] : memref<42x128xbf16, #tpu.memory_space<vmem>>, vector<42x128xbf16>
    %cst = arith.constant dense<0.000000e+00> : vector<8x128xf32>
    %2 = tpu.matmul %0, %1, %cst {dimension_numbers = #tpu.dot_dimension_numbers<[1], [0], [0], [1], [0, 0, 1, 1], [], []>} : vector<8x42xbf16>, vector<42x128xbf16>, vector<8x128xf32> -> vector<8x128xf32>
    %c0_3 = arith.constant 0 : index
    %c0_4 = arith.constant 0 : index
    %3 = vector.load %arg3[%c0_3, %c0_4] : memref<1x128xf32, #tpu.memory_space<vmem>>, vector<1x128xf32>
    %4 = vector.broadcast %3 : vector<1x128xf32> to vector<8x128xf32>
    %5 = arith.addf %2, %4 : vector<8x128xf32>
    %cst_5 = arith.constant 0.000000e+00 : f32
    %6 = vector.broadcast %cst_5 : f32 to vector<8x128xf32>
    %7 = arith.maximumf %5, %6 : vector<8x128xf32>
    %c0_6 = arith.constant 0 : index
    %c0_7 = arith.constant 0 : index
    %8 = vector.load %arg4[%c0_6, %c0_7] : memref<128x128xf32, #tpu.memory_space<vmem>>, vector<128x128xf32>
    %cst_8 = arith.constant dense<0.000000e+00> : vector<8x128xf32>
    %9 = tpu.matmul %7, %8, %cst_8 {dimension_numbers = #tpu.dot_dimension_numbers<[1], [0], [0], [1], [0, 0, 1, 1], [], []>} : vector<8x128xf32>, vector<128x128xf32>, vector<8x128xf32> -> vector<8x128xf32>
    %c0_9 = arith.constant 0 : index
    %c0_10 = arith.constant 0 : index
    %10 = vector.load %arg5[%c0_9, %c0_10] : memref<1x128xf32, #tpu.memory_space<vmem>>, vector<1x128xf32>
    %11 = vector.broadcast %10 : vector<1x128xf32> to vector<8x128xf32>
    %12 = arith.addf %9, %11 : vector<8x128xf32>
    %13 = vector.extract_strided_slice %12 {offsets = [0, 0], sizes = [8, 7], strides = [1, 1]} : vector<8x128xf32> to vector<8x7xf32>
    %c0_11 = arith.constant 0 : index
    %c0_12 = arith.constant 0 : index
    %14 = vector.load %arg6[%c0_11, %c0_12] : memref<8x7xf32, #tpu.memory_space<vmem>>, vector<8x7xf32>
    tpu.vector_store %arg6[%c0_11, %c0_12], %13 {strides = array<i32>} : memref<8x7xf32, #tpu.memory_space<vmem>>, vector<8x7xf32>,
    return
  }
  func.func @transform_0(%arg0: i32) -> (i32, i32) {
    %c0_i32 = arith.constant 0 : i32
    %c0_i32_0 = arith.constant 0 : i32
    return %arg0, %c0_i32 : i32, i32
  }
  func.func @transform_1(%arg0: i32) -> (i32, i32) {
    %c0_i32 = arith.constant 0 : i32
    %c0_i32_0 = arith.constant 0 : i32
    %c0_i32_1 = arith.constant 0 : i32
    return %c0_i32, %c0_i32_0 : i32, i32
  }
  func.func @transform_2(%arg0: i32) -> (i32, i32) {
    %c0_i32 = arith.constant 0 : i32
    %c0_i32_0 = arith.constant 0 : i32
    %c0_i32_1 = arith.constant 0 : i32
    return %c0_i32, %c0_i32_0 : i32, i32
  }
  func.func @transform_3(%arg0: i32) -> (i32, i32) {
    %c0_i32 = arith.constant 0 : i32
    %c0_i32_0 = arith.constant 0 : i32
    %c0_i32_1 = arith.constant 0 : i32
    return %c0_i32, %c0_i32_0 : i32, i32
  }
  func.func @transform_4(%arg0: i32) -> (i32, i32) {
    %c0_i32 = arith.constant 0 : i32
    %c0_i32_0 = arith.constant 0 : i32
    %c0_i32_1 = arith.constant 0 : i32
    return %c0_i32, %c0_i32_0 : i32, i32
  }
  func.func @transform_5(%arg0: i32) -> (i32, i32) {
    %c0_i32 = arith.constant 0 : i32
    %c0_i32_0 = arith.constant 0 : i32
    return %arg0, %c0_i32 : i32, i32
  }
}

</mosaic_0001>

<llo_original>
// kernel: tpu_custom_call.1
$region0: #{tpu_custom_call.1}
  #allocation0 [shape = 'u32[]', space=smem, size = 0x4, offset = 0x4, fixed_abs, tag = 'smem constant byte address 0x4 - core index']
  #allocation1 [shape = 'u32[72,128]{1,0:T(1,128)}', space=vmem, size = 0x9000, scoped, tag = 'internal scratch']
  %s0 = inlined_call_operand.hbm [shape: bf16[8,42], index: 0, kind: input, shape index: {}]
  %s1 = inlined_call_operand.hbm [shape: bf16[42,128], index: 1, kind: input, shape index: {}]
  %s2 = inlined_call_operand.vmem [shape: f32[1,128], index: 2, kind: input, shape index: {}]
  %s3 = inlined_call_operand.hbm [shape: f32[128,128], index: 3, kind: input, shape index: {}]
  %s4 = inlined_call_operand.vmem [shape: f32[1,128], index: 4, kind: input, shape index: {}]
  %s5 = inlined_call_operand.hbm [shape: f32[8,7], index: 5, kind: output, shape index: {}]
  %s6 = sld [smem:[#allocation0]]
  $region42: #{tpu_custom_call.1} parent=0
    _
  %s8 = ssub.s32 1, %s6
  %s9 = scalar_select 0, %s8, %s6
  $region1: #{tpu_custom_call.1} parent=0
    #allocation2 [shape = 'u8[2048]{0}', space=vmem, size = 0x800, scoped, tag = 'input window, operand 0, single buffered']
    #allocation3 [shape = 's32[1]{0}', space=sflag, size = 0x4, scoped, tag = 'scoped memory for tpu_custom_call.1']
    #allocation4 [shape = 's32[1]{0}', space=sflag, size = 0x4, scoped, tag = 'scoped memory for tpu_custom_call.1']
    #allocation5 [shape = 'u8[12288]{0}', space=vmem, size = 0x3000, scoped, tag = 'input window, operand 1, single buffered']
    #allocation6 [shape = 's32[1]{0}', space=sflag, size = 0x4, scoped, tag = 'scoped memory for tpu_custom_call.1']
    #allocation7 [shape = 'u8[65536]{0}', space=vmem, size = 0x10000, scoped, tag = 'input window, operand 3, single buffered']
    #allocation8 [shape = 'u8[4096]{0}', space=vmem, size = 0x1000, scoped, tag = 'output window, operand 0, single buffered']
    %10 = vsyncpa [#allocation3], 0
    %11 = vsyncpa [#allocation6], 0
    %12 = vsyncpa [#allocation4], 0
    // Predicated region
    $region2: #{tpu_custom_call.1} parent=1 // pred_check
      _
    $region3: #{tpu_custom_call.1} parent=1 // pred_check_branch
      %14 = sbr.rel (0) target = $region5
    $region4: #{tpu_custom_call.1} parent=1 // pred_region
      %16 = vsyncadd [#allocation3], 0
      %s18 = sshll.u32 %s0, 4
      %s19 = int_to_ptr.hbm [resolvable:$true] %s18
      %s20 = sshll.u32 [#allocation2], 4
      %s21 = int_to_ptr.vmem [resolvable:$true] %s20
      %23 = dma.hbm_to_vmem [thread:$0]  %s19, 64, %s21, [#allocation3]
    $region5: #{tpu_custom_call.1} parent=1 // pred_fallthru
      _
    // Predicated region
    $region6: #{tpu_custom_call.1} parent=1 // pred_check
      _
    $region7: #{tpu_custom_call.1} parent=1 // pred_check_branch
      %25 = sbr.rel (0) target = $region9
    $region8: #{tpu_custom_call.1} parent=1 // pred_region
      %27 = vsyncadd [#allocation6], 0
      %s28 = sshll.u32 %s1, 4
      %s29 = int_to_ptr.hbm [resolvable:$true] %s28
      %s30 = sshll.u32 [#allocation5], 4
      %s31 = int_to_ptr.vmem [resolvable:$true] %s30
      %36 = dma.hbm_to_vmem [thread:$0]  %s29, 384, %s31, [#allocation6], 64, 64, 4
    $region9: #{tpu_custom_call.1} parent=1 // pred_fallthru
      _
    // Predicated region
    $region10: #{tpu_custom_call.1} parent=1 // pred_check
      _
    $region11: #{tpu_custom_call.1} parent=1 // pred_check_branch
      %38 = sbr.rel (0) target = $region13
    $region12: #{tpu_custom_call.1} parent=1 // pred_region
      _
    $region13: #{tpu_custom_call.1} parent=1 // pred_fallthru
      _
    // Predicated region
    $region14: #{tpu_custom_call.1} parent=1 // pred_check
      _
    $region15: #{tpu_custom_call.1} parent=1 // pred_check_branch
      %40 = sbr.rel (0) target = $region17
    $region16: #{tpu_custom_call.1} parent=1 // pred_region
      %42 = vsyncadd [#allocation6], 0
      %s43 = sshll.u32 %s3, 4
      %s44 = int_to_ptr.hbm [resolvable:$true] %s43
      %s45 = sshll.u32 [#allocation7], 4
      %s46 = int_to_ptr.vmem [resolvable:$true] %s45
      %51 = dma.hbm_to_vmem [thread:$0]  %s44, 2048, %s46, [#allocation6], 128, 128, 8
    $region17: #{tpu_custom_call.1} parent=1 // pred_fallthru
      _
    // Predicated region
    $region18: #{tpu_custom_call.1} parent=1 // pred_check
      _
    $region19: #{tpu_custom_call.1} parent=1 // pred_check_branch
      %53 = sbr.rel (0) target = $region21
    $region20: #{tpu_custom_call.1} parent=1 // pred_region
      _
    $region21: #{tpu_custom_call.1} parent=1 // pred_fallthru
      _
    // Predicated region
    $region22: #{tpu_custom_call.1} parent=1 // pred_check
      _
    $region23: #{tpu_custom_call.1} parent=1 // pred_check_branch
      %55 = sbr.rel (0) target = $region25
    $region24: #{tpu_custom_call.1} parent=1 // pred_region
      %57 = dma.done [#allocation3], 64
    $region25: #{tpu_custom_call.1} parent=1 // pred_fallthru
      _
    // Predicated region
    $region26: #{tpu_custom_call.1} parent=1 // pred_check
      _
    $region27: #{tpu_custom_call.1} parent=1 // pred_check_branch
      %59 = sbr.rel (0) target = $region29
    $region28: #{tpu_custom_call.1} parent=1 // pred_region
      %61 = dma.done [#allocation6], 384
    $region29: #{tpu_custom_call.1} parent=1 // pred_fallthru
      _
    // Predicated region
    $region30: #{tpu_custom_call.1} parent=1 // pred_check
      _
    $region31: #{tpu_custom_call.1} parent=1 // pred_check_branch
      %63 = sbr.rel (0) target = $region33
    $region32: #{tpu_custom_call.1} parent=1 // pred_region
      %65 = dma.done [#allocation6], 2048
    $region33: #{tpu_custom_call.1} parent=1 // pred_fallthru
      _
    %v67 = vld [vmem:[#allocation2] sm:$0xf]
    %v68 = vld [vmem:[#allocation5] sm:$0xf]
    %v69 = vld [vmem:[#allocation5 + $0x4] sm:$0xf]
    %v70 = vld [vmem:[#allocation5 + $0x8] sm:$0xf]
    %v71 = vld [vmem:[#allocation5 + $0xc] sm:$0xf]
    %v72 = vld [vmem:[#allocation5 + $0x10] sm:$0xf]
    %v73 = vld [vmem:[#allocation5 + $0x14] sm:$0x1]
    %v74 = vld [vmem:[%s2] sm:$0x1]
    %v76 = vperm.slane %v74, 0
    %v84 = vunpack.c.l.b16 %v68
    %v85 = vunpack.c.l.b16 %v69
    %v86 = vunpack.c.l.b16 %v70
    %v87 = vunpack.c.l.b16 %v71
    %v88 = vunpack.c.l.b16 %v72
    %v89 = vunpack.c.l.b16 %v73
    %v90 = vpack.c.b16 %v85, %v84
    %v91 = vpack.c.b16 %v87, %v86
    %v92 = vpack.c.b16 %v89, %v88
    %vm95 = vcmask 343040
    %v97 = vsel %vm95, %v67, 0
    %vm99 = vcmask 1044480
    %v101 = vsel %vm99, %v92, 0
    %103 = vmatpush.bf16.msra.mxu0 0
    %104 = vmatpush.bf16.msra.mxu0 0
    %105 = vmatpush.bf16.msra.mxu0 0
    %106 = vmatpush.bf16.msra.mxu0 0
    %107 = vmatpush.bf16.msra.mxu0 0
    %108 = vmatpush.bf16.msra.mxu0 %v101
    %109 = vmatpush.bf16.msra.mxu0 %v91
    %110 = vmatpush.bf16.msra.mxu0 %v90
    %111 = vmatmul.bf16.gmra.mxu0 %v97
    %v112 = vpop.f32.mrf.mxu0
    %v113 = vadd.f32 %v76, %v112
    %v114 = vpop.f32.mrf.mxu0
    %115 = vdwg.mxu0
    %v116 = vmax.f32 %v113, 0.0
    %v117 = vld [vmem:[#allocation7] sm:$0xff]
    %v118 = vld [vmem:[#allocation7 + $0x8] sm:$0xff]
    %v119 = vld [vmem:[#allocation7 + $0x10] sm:$0xff]
    %v120 = vld [vmem:[#allocation7 + $0x18] sm:$0xff]
    %v121 = vld [vmem:[#allocation7 + $0x20] sm:$0xff]
    %v122 = vld [vmem:[#allocation7 + $0x28] sm:$0xff]
    %v123 = vld [vmem:[#allocation7 + $0x30] sm:$0xff]
    %v124 = vld [vmem:[#allocation7 + $0x38] sm:$0xff]
    %v125 = vld [vmem:[#allocation7 + $0x40] sm:$0xff]
    %v126 = vld [vmem:[#allocation7 + $0x48] sm:$0xff]
    %v127 = vld [vmem:[#allocation7 + $0x50] sm:$0xff]
    %v128 = vld [vmem:[#allocation7 + $0x58] sm:$0xff]
    %v129 = vld [vmem:[#allocation7 + $0x60] sm:$0xff]
    %v130 = vld [vmem:[#allocation7 + $0x68] sm:$0xff]
    %v131 = vld [vmem:[#allocation7 + $0x70] sm:$0xff]
    %v132 = vld [vmem:[#allocation7 + $0x78] sm:$0xff]
    %v133 = vld [vmem:[%s4] sm:$0x1]
    %v135 = vperm.slane %v133, 0
    %137 = vmatpush.msra.mxu0 %v132
    %138 = vmatpush.msra.mxu0 %v131
    %139 = vmatpush.msra.mxu0 %v130
    %140 = vmatpush.msra.mxu0 %v129
    %141 = vmatpush.msra.mxu0 %v128
    %142 = vmatpush.msra.mxu0 %v127
    %143 = vmatpush.msra.mxu0 %v126
    %144 = vmatpush.msra.mxu0 %v125
    %145 = vmatpush.msra.mxu0 %v124
    %146 = vmatpush.msra.mxu0 %v123
    %147 = vmatpush.msra.mxu0 %v122
    %148 = vmatpush.msra.mxu0 %v121
    %149 = vmatpush.msra.mxu0 %v120
    %150 = vmatpush.msra.mxu0 %v119
    %151 = vmatpush.msra.mxu0 %v118
    %152 = vmatpush.msra.mxu0 %v117
    %153 = vmatmul.f32.gmra.mxu0 %v116
    %v154 = vpop.f32.mrf.mxu0
    %v155 = vadd.f32 %v135, %v154
    %156 = vdwg.mxu0
    %vm157 = vcmask 56320
    %158 = vst.msk [vmem:[#allocation8] sm:$0xff] %vm157, %v155
    // Predicated region
    $region34: #{tpu_custom_call.1} parent=1 // pred_check
      _
    $region35: #{tpu_custom_call.1} parent=1 // pred_check_branch
      %160 = sbr.rel (0) target = $region37
    $region36: #{tpu_custom_call.1} parent=1 // pred_region
      %162 = vsyncadd [#allocation4], 0
      %s164 = sshll.u32 [#allocation8], 4
      %s165 = int_to_ptr.vmem [resolvable:$true] %s164
      %s166 = sshll.u32 %s5, 4
      %s167 = int_to_ptr.hbm [resolvable:$true] %s166
      %169 = dma.vmem_to_hbm [thread:$0]  %s165, 128, %s167, [#allocation4]
    $region37: #{tpu_custom_call.1} parent=1 // pred_fallthru
      _
    // Predicated region
    $region38: #{tpu_custom_call.1} parent=1 // pred_check
      _
    $region39: #{tpu_custom_call.1} parent=1 // pred_check_branch
      %171 = sbr.rel (0) target = $region41
    $region40: #{tpu_custom_call.1} parent=1 // pred_region
      %173 = dma.done [#allocation4], 128
    $region41: #{tpu_custom_call.1} parent=1 // pred_fallthru
      _
    %174 = vsyncpa [#allocation3], 1
    %175 = vsyncpa [#allocation6], 1
    %176 = vsyncpa [#allocation4], 1

</llo_original>
